<compile_context>
chip_gen: v7x
topology: tpu7x:2x2x1
jax: 0.10.0
libtpu: 0.0.40
codegen_flags: <defaults>
</compile_context>

<pallas_src>
from functools import partial

import jax
import jax.numpy as jnp
from jax.experimental import pallas as pl
from jax.experimental.pallas import tpu as pltpu

HIDDEN = 128  # fixed by the module definition


def _round_up(x, m):
    return (x + m - 1) // m * m


def _cdiv(a, b):
    return -(-a // b)


# ----------------------------------------------------------------------------
# Fused MLP kernel: one batch tile per grid step, weights resident in VMEM.
# Specialized (via closure) on the static lane-padding of the input features.
# ----------------------------------------------------------------------------
def _make_mlp_kernel(d_pad):
    def kernel(x_ref, w1_ref, b1_ref, w2_ref, b2_ref, w3_ref, b3_ref, o_ref):
        x = x_ref[...].astype(jnp.bfloat16)               # cast in-kernel (f32 in HBM)
        if d_pad:                                         # static; no-op when D % 16 == 0
            x = jnp.pad(x, ((0, 0), (0, d_pad)))
        h1 = jnp.dot(x, w1_ref[...], preferred_element_type=jnp.float32) + b1_ref[...]
        h1 = jnp.maximum(h1, 0.0)                         # f32 epilogue (v5e VPU: no bf16)
        h2 = jnp.dot(h1.astype(jnp.bfloat16), w2_ref[...],
                     preferred_element_type=jnp.float32) + b2_ref[...]
        h2 = jnp.maximum(h2, 0.0)
        o = jnp.dot(h2.astype(jnp.bfloat16), w3_ref[...],
                    preferred_element_type=jnp.float32) + b3_ref[...]
        o_ref[...] = o.astype(o_ref.dtype)                # lane-dense (Ap % 128 == 0) store
    return kernel


def _choose_tile(B, tm):
    """Pick rows-per-tile: big tiles, minimal padding, grid >= 2 when splittable."""
    n_tiles = max(_cdiv(B, tm), 1)
    if B > 8 and n_tiles < 2:
        n_tiles = 2            # keep >= 2 grid steps so v7x's two TCs both get work
    tm_eff = _round_up(_cdiv(B, n_tiles), 8)
    return tm_eff


# ----------------------------------------------------------------------------
# One-time parameter preprocessing (hoisted out of the per-call path).
# ----------------------------------------------------------------------------
def prepare_params(params):
    D, H = params["w1"].shape
    A = params["w3"].shape[1]
    Dp = _round_up(D, 16)                       # bf16 packs 16 rows/vreg (sublane-dense w1)
    Ap = _round_up(max(A, 128), 128)            # lane-dense output -> unmasked vst
    return {
        "w1": jnp.pad(params["w1"], ((0, Dp - D), (0, 0))).astype(jnp.bfloat16),
        "b1": params["b1"].reshape(1, H).astype(jnp.float32),
        "w2": params["w2"].astype(jnp.bfloat16),
        "b2": params["b2"].reshape(1, H).astype(jnp.float32),
        "w3": jnp.pad(params["w3"], ((0, 0), (0, Ap - A))).astype(jnp.bfloat16),
        "b3": jnp.pad(params["b3"], (0, Ap - A)).reshape(1, Ap).astype(jnp.float32),
    }


# ----------------------------------------------------------------------------
# Forward pass. `prepped` is the output of prepare_params().
# ----------------------------------------------------------------------------
@partial(jax.jit, static_argnames=("num_actions", "tm", "out_dtype"))
def mlp_forward(x, prepped, *, num_actions, tm=2048, out_dtype=jnp.float32):
    B, D = x.shape
    w1, b1 = prepped["w1"], prepped["b1"]
    w2, b2 = prepped["w2"], prepped["b2"]
    w3, b3 = prepped["w3"], prepped["b3"]
    Dp, H = w1.shape
    Ap = w3.shape[1]
    d_pad = Dp - D

    tm_eff = _choose_tile(B, tm)
    Bp = _round_up(B, tm_eff)
    grid = (Bp // tm_eff,)

    # Only a (cheap, f32) pad of the batch remainder; no activation dtype copy.
    x_in = x if Bp == B else jnp.pad(x, ((0, Bp - B), (0, 0)))

    flops = 2 * Bp * (Dp * H + H * H + H * Ap)
    bytes_accessed = (Bp * D * 4                                   # x (f32 in)
                      + (w1.size + w2.size + w3.size) * 2          # bf16 weights
                      + (b1.size + b2.size + b3.size) * 4          # f32 biases
                      + Bp * Ap * jnp.dtype(out_dtype).itemsize)   # out

    out = pl.pallas_call(
        _make_mlp_kernel(d_pad),
        out_shape=jax.ShapeDtypeStruct((Bp, Ap), out_dtype),
        grid=grid,
        in_specs=[
            pl.BlockSpec((tm_eff, D), lambda i: (i, 0)),       # x batch tile (f32)
            pl.BlockSpec((Dp, H), lambda i: (0, 0)),           # w1 (resident)
            pl.BlockSpec((1, H), lambda i: (0, 0)),            # b1
            pl.BlockSpec((H, H), lambda i: (0, 0)),            # w2
            pl.BlockSpec((1, H), lambda i: (0, 0)),            # b2
            pl.BlockSpec((H, Ap), lambda i: (0, 0)),           # w3 (lane-padded)
            pl.BlockSpec((1, Ap), lambda i: (0, 0)),           # b3 (lane-padded)
        ],
        out_specs=pl.BlockSpec((tm_eff, Ap), lambda i: (i, 0)),
        compiler_params=pltpu.CompilerParams(
            dimension_semantics=("parallel",)),
        cost_estimate=pl.CostEstimate(
            flops=flops, transcendentals=0, bytes_accessed=bytes_accessed),
    )(x_in, w1, b1, w2, b2, w3, b3)

    return out[:B, :num_actions].astype(jnp.float32)


# ----------------------------------------------------------------------------
# Parameter init matching torch.nn.Linear defaults (U(-1/sqrt(fan_in), +...)).
# Weights stored as (in_features, out_features).
# ----------------------------------------------------------------------------
def init_params(key, obs_dims, action_dims):
    def u(k, shape, fan_in):
        bound = 1.0 / jnp.sqrt(jnp.float32(fan_in))
        return jax.random.uniform(k, shape, jnp.float32, -bound, bound)

    ks = jax.random.split(key, 6)
    return {
        "w1": u(ks[0], (obs_dims, HIDDEN), obs_dims),
        "b1": u(ks[1], (HIDDEN,), obs_dims),
        "w2": u(ks[2], (HIDDEN, HIDDEN), HIDDEN),
        "b2": u(ks[3], (HIDDEN,), HIDDEN),
        "w3": u(ks[4], (HIDDEN, action_dims), HIDDEN),
        "b3": u(ks[5], (action_dims,), HIDDEN),
    }


# ----------------------------------------------------------------------------
# Pure-JAX f32 reference for correctness check.
# ----------------------------------------------------------------------------
def reference_forward(x, p):
    h1 = jnp.maximum(x @ p["w1"] + p["b1"], 0.0)
    h2 = jnp.maximum(h1 @ p["w2"] + p["b2"], 0.0)
    return h2 @ p["w3"] + p["b3"]


# ----------------------------------------------------------------------------
if __name__ == "__main__":
    B, obs_dims, num_actions = 2, 16, 6

    key = jax.random.PRNGKey(0)
    k_x, k_p, k_x2 = jax.random.split(key, 3)
    x = jax.random.normal(k_x, (B, obs_dims), jnp.float32)
    params = init_params(k_p, obs_dims, num_actions)
    prepped = prepare_params(params)          # one-time weight prep (bf16 + padding)

    # Small inference-style batch (single tile).
    q = mlp_forward(x, prepped, num_actions=num_actions)
    q = jax.block_until_ready(q)
    q_ref = reference_forward(x, params)
    assert q.shape == (B, num_actions)
    # bf16 MXU inputs with f32 accumulation vs pure-f32 reference.
    assert jnp.allclose(q, q_ref, rtol=2e-2, atol=2e-2), (q, q_ref)

    # Non-tile-aligned batch exercising the multi-tile ("parallel") grid path.
    B2 = 272
    x2 = jax.random.normal(k_x2, (B2, obs_dims), jnp.float32)
    q2 = jax.block_until_ready(mlp_forward(x2, prepped, num_actions=num_actions))
    q2_ref = reference_forward(x2, params)
    assert q2.shape == (B2, num_actions)
    assert jnp.allclose(q2, q2_ref, rtol=2e-2, atol=2e-2)

    print("KERNEL_OK")
</pallas_src>

<mosaic_0001>
module attributes {stable_mosaic.version = 11 : i64} {
  func.func @kernel(%arg0: i32, %arg1: memref<8x16xf32, #tpu.memory_space<vmem>>, %arg2: memref<16x128xbf16, #tpu.memory_space<vmem>>, %arg3: memref<1x128xf32, #tpu.memory_space<vmem>>, %arg4: memref<128x128xbf16, #tpu.memory_space<vmem>>, %arg5: memref<1x128xf32, #tpu.memory_space<vmem>>, %arg6: memref<128x128xbf16, #tpu.memory_space<vmem>>, %arg7: memref<1x128xf32, #tpu.memory_space<vmem>>, %arg8: memref<8x128xf32, #tpu.memory_space<vmem>>) attributes {dimension_semantics = [#tpu.dimension_semantics<parallel>], iteration_bounds = array<i64: 1>, scalar_prefetch = 0 : i64, scratch_operands = 0 : i64, tpu.core_type = #tpu.core_type<tc>, window_params = [{transform_indices = @transform_0, window_bounds = array<i64: 8, 16>}, {pipeline_mode = #tpu.pipeline_mode<synchronous>, transform_indices = @transform_1, window_bounds = array<i64: 16, 128>}, {pipeline_mode = #tpu.pipeline_mode<synchronous>, transform_indices = @transform_2, window_bounds = array<i64: 1, 128>}, {pipeline_mode = #tpu.pipeline_mode<synchronous>, transform_indices = @transform_3, window_bounds = array<i64: 128, 128>}, {pipeline_mode = #tpu.pipeline_mode<synchronous>, transform_indices = @transform_4, window_bounds = array<i64: 1, 128>}, {pipeline_mode = #tpu.pipeline_mode<synchronous>, transform_indices = @transform_5, window_bounds = array<i64: 128, 128>}, {pipeline_mode = #tpu.pipeline_mode<synchronous>, transform_indices = @transform_6, window_bounds = array<i64: 1, 128>}, {transform_indices = @transform_7, window_bounds = array<i64: 8, 128>}]} {
    %c0 = arith.constant 0 : index
    %c0_0 = arith.constant 0 : index
    %0 = vector.load %arg1[%c0, %c0_0] : memref<8x16xf32, #tpu.memory_space<vmem>>, vector<8x16xf32>
    %1 = arith.truncf %0 : vector<8x16xf32> to vector<8x16xbf16>
    %c0_1 = arith.constant 0 : index
    %c0_2 = arith.constant 0 : index
    %2 = vector.load %arg2[%c0_1, %c0_2] : memref<16x128xbf16, #tpu.memory_space<vmem>>, vector<16x128xbf16>
    %cst = arith.constant dense<0.000000e+00> : vector<8x128xf32>
    %3 = tpu.matmul %1, %2, %cst {dimension_numbers = #tpu.dot_dimension_numbers<[1], [0], [0], [1], [0, 0, 1, 1], [], []>} : vector<8x16xbf16>, vector<16x128xbf16>, vector<8x128xf32> -> vector<8x128xf32>
    %c0_3 = arith.constant 0 : index
    %c0_4 = arith.constant 0 : index
    %4 = vector.load %arg3[%c0_3, %c0_4] : memref<1x128xf32, #tpu.memory_space<vmem>>, vector<1x128xf32>
    %5 = vector.broadcast %4 : vector<1x128xf32> to vector<8x128xf32>
    %6 = arith.addf %3, %5 : vector<8x128xf32>
    %cst_5 = arith.constant 0.000000e+00 : f32
    %7 = vector.broadcast %cst_5 : f32 to vector<8x128xf32>
    %8 = arith.maximumf %6, %7 : vector<8x128xf32>
    %9 = arith.truncf %8 : vector<8x128xf32> to vector<8x128xbf16>
    %c0_6 = arith.constant 0 : index
    %c0_7 = arith.constant 0 : index
    %10 = vector.load %arg4[%c0_6, %c0_7] : memref<128x128xbf16, #tpu.memory_space<vmem>>, vector<128x128xbf16>
    %cst_8 = arith.constant dense<0.000000e+00> : vector<8x128xf32>
    %11 = tpu.matmul %9, %10, %cst_8 {dimension_numbers = #tpu.dot_dimension_numbers<[1], [0], [0], [1], [0, 0, 1, 1], [], []>} : vector<8x128xbf16>, vector<128x128xbf16>, vector<8x128xf32> -> vector<8x128xf32>
    %c0_9 = arith.constant 0 : index
    %c0_10 = arith.constant 0 : index
    %12 = vector.load %arg5[%c0_9, %c0_10] : memref<1x128xf32, #tpu.memory_space<vmem>>, vector<1x128xf32>
    %13 = vector.broadcast %12 : vector<1x128xf32> to vector<8x128xf32>
    %14 = arith.addf %11, %13 : vector<8x128xf32>
    %cst_11 = arith.constant 0.000000e+00 : f32
    %15 = vector.broadcast %cst_11 : f32 to vector<8x128xf32>
    %16 = arith.maximumf %14, %15 : vector<8x128xf32>
    %17 = arith.truncf %16 : vector<8x128xf32> to vector<8x128xbf16>
    %c0_12 = arith.constant 0 : index
    %c0_13 = arith.constant 0 : index
    %18 = vector.load %arg6[%c0_12, %c0_13] : memref<128x128xbf16, #tpu.memory_space<vmem>>, vector<128x128xbf16>
    %cst_14 = arith.constant dense<0.000000e+00> : vector<8x128xf32>
    %19 = tpu.matmul %17, %18, %cst_14 {dimension_numbers = #tpu.dot_dimension_numbers<[1], [0], [0], [1], [0, 0, 1, 1], [], []>} : vector<8x128xbf16>, vector<128x128xbf16>, vector<8x128xf32> -> vector<8x128xf32>
    %c0_15 = arith.constant 0 : index
    %c0_16 = arith.constant 0 : index
    %20 = vector.load %arg7[%c0_15, %c0_16] : memref<1x128xf32, #tpu.memory_space<vmem>>, vector<1x128xf32>
    %21 = vector.broadcast %20 : vector<1x128xf32> to vector<8x128xf32>
    %22 = arith.addf %19, %21 : vector<8x128xf32>
    %c0_17 = arith.constant 0 : index
    %c0_18 = arith.constant 0 : index
    %23 = vector.load %arg8[%c0_17, %c0_18] : memref<8x128xf32, #tpu.memory_space<vmem>>, vector<8x128xf32>
    tpu.vector_store %arg8[%c0_17, %c0_18], %22 {strides = array<i32>} : memref<8x128xf32, #tpu.memory_space<vmem>>, vector<8x128xf32>,
    return
  }
  func.func @transform_0(%arg0: i32) -> (i32, i32) {
    %c0_i32 = arith.constant 0 : i32
    %c0_i32_0 = arith.constant 0 : i32
    return %arg0, %c0_i32 : i32, i32
  }
  func.func @transform_1(%arg0: i32) -> (i32, i32) {
    %c0_i32 = arith.constant 0 : i32
    %c0_i32_0 = arith.constant 0 : i32
    %c0_i32_1 = arith.constant 0 : i32
    return %c0_i32, %c0_i32_0 : i32, i32
  }
  func.func @transform_2(%arg0: i32) -> (i32, i32) {
    %c0_i32 = arith.constant 0 : i32
    %c0_i32_0 = arith.constant 0 : i32
    %c0_i32_1 = arith.constant 0 : i32
    return %c0_i32, %c0_i32_0 : i32, i32
  }
  func.func @transform_3(%arg0: i32) -> (i32, i32) {
    %c0_i32 = arith.constant 0 : i32
    %c0_i32_0 = arith.constant 0 : i32
    %c0_i32_1 = arith.constant 0 : i32
    return %c0_i32, %c0_i32_0 : i32, i32
  }
  func.func @transform_4(%arg0: i32) -> (i32, i32) {
    %c0_i32 = arith.constant 0 : i32
    %c0_i32_0 = arith.constant 0 : i32
    %c0_i32_1 = arith.constant 0 : i32
    return %c0_i32, %c0_i32_0 : i32, i32
  }
  func.func @transform_5(%arg0: i32) -> (i32, i32) {
    %c0_i32 = arith.constant 0 : i32
    %c0_i32_0 = arith.constant 0 : i32
    %c0_i32_1 = arith.constant 0 : i32
    return %c0_i32, %c0_i32_0 : i32, i32
  }
  func.func @transform_6(%arg0: i32) -> (i32, i32) {
    %c0_i32 = arith.constant 0 : i32
    %c0_i32_0 = arith.constant 0 : i32
    %c0_i32_1 = arith.constant 0 : i32
    return %c0_i32, %c0_i32_0 : i32, i32
  }
  func.func @transform_7(%arg0: i32) -> (i32, i32) {
    %c0_i32 = arith.constant 0 : i32
    %c0_i32_0 = arith.constant 0 : i32
    return %arg0, %c0_i32 : i32, i32
  }
}

</mosaic_0001>

<llo_original>
// kernel: mlp_forward.1
$region0: #{mlp_forward.1}
  #allocation0 [shape = 'u32[]', space=smem, size = 0x4, offset = 0x4, fixed_abs, tag = 'smem constant byte address 0x4 - core index']
  #allocation1 [shape = 'u32[144,128]{1,0:T(1,128)}', space=vmem, size = 0x12000, scoped, tag = 'internal scratch']
  %s0 = inlined_call_operand.vmem [shape: f32[8,16], index: 0, kind: input, shape index: {}]
  %s1 = inlined_call_operand.vmem [shape: bf16[16,128], index: 1, kind: input, shape index: {}]
  %s2 = inlined_call_operand.vmem [shape: f32[1,128], index: 2, kind: input, shape index: {}]
  %s3 = inlined_call_operand.hbm [shape: bf16[128,128], index: 3, kind: input, shape index: {}]
  %s4 = inlined_call_operand.vmem [shape: f32[1,128], index: 4, kind: input, shape index: {}]
  %s5 = inlined_call_operand.hbm [shape: bf16[128,128], index: 5, kind: input, shape index: {}]
  %s6 = inlined_call_operand.vmem [shape: f32[1,128], index: 6, kind: input, shape index: {}]
  %s7 = inlined_call_operand.vmem [shape: f32[8,128], index: 7, kind: output, shape index: {}]
  %s8 = sld [smem:[#allocation0]]
  $region46: #{mlp_forward.1} parent=0
    _
  %s10 = ssub.s32 1, %s8
  %s11 = scalar_select 0, %s10, %s8
  $region1: #{mlp_forward.1} parent=0
    #allocation2 [shape = 'u8[32768]{0}', space=vmem, size = 0x8000, scoped, tag = 'input window, operand 3, single buffered']
    #allocation3 [shape = 's32[1]{0}', space=sflag, size = 0x4, scoped, tag = 'scoped memory for mlp_forward.1']
    #allocation4 [shape = 'u8[32768]{0}', space=vmem, size = 0x8000, scoped, tag = 'input window, operand 5, single buffered']
    #allocation5 [shape = 's32[1]{0}', space=sflag, size = 0x4, scoped, tag = 'scoped memory for mlp_forward.1']
    %12 = vsyncpa [#allocation3], 0
    %13 = vsyncpa [#allocation5], 0
    // Predicated region
    $region2: #{mlp_forward.1} parent=1 // pred_check
      _
    $region3: #{mlp_forward.1} parent=1 // pred_check_branch
      %15 = sbr.rel (0) target = $region5
    $region4: #{mlp_forward.1} parent=1 // pred_region
      _
    $region5: #{mlp_forward.1} parent=1 // pred_fallthru
      _
    // Predicated region
    $region6: #{mlp_forward.1} parent=1 // pred_check
      _
    $region7: #{mlp_forward.1} parent=1 // pred_check_branch
      %17 = sbr.rel (0) target = $region9
    $region8: #{mlp_forward.1} parent=1 // pred_region
      _
    $region9: #{mlp_forward.1} parent=1 // pred_fallthru
      _
    // Predicated region
    $region10: #{mlp_forward.1} parent=1 // pred_check
      _
    $region11: #{mlp_forward.1} parent=1 // pred_check_branch
      %19 = sbr.rel (0) target = $region13
    $region12: #{mlp_forward.1} parent=1 // pred_region
      _
    $region13: #{mlp_forward.1} parent=1 // pred_fallthru
      _
    // Predicated region
    $region14: #{mlp_forward.1} parent=1 // pred_check
      _
    $region15: #{mlp_forward.1} parent=1 // pred_check_branch
      %21 = sbr.rel (0) target = $region17
    $region16: #{mlp_forward.1} parent=1 // pred_region
      %s23 = ssub.s32 1024, 1024
      %24 = vsyncadd [#allocation3], %s23
      %s25 = sshll.u32 [#allocation2], 4
      %s26 = int_to_ptr.vmem [resolvable:$true] %s25
      %31 = dma.hbm_to_vmem [thread:$0]  %s3, 1024, %s26, [#allocation3], 64, 64, 4
    $region17: #{mlp_forward.1} parent=1 // pred_fallthru
      _
    // Predicated region
    $region18: #{mlp_forward.1} parent=1 // pred_check
      _
    $region19: #{mlp_forward.1} parent=1 // pred_check_branch
      %33 = sbr.rel (0) target = $region21
    $region20: #{mlp_forward.1} parent=1 // pred_region
      _
    $region21: #{mlp_forward.1} parent=1 // pred_fallthru
      _
    // Predicated region
    $region22: #{mlp_forward.1} parent=1 // pred_check
      _
    $region23: #{mlp_forward.1} parent=1 // pred_check_branch
      %35 = sbr.rel (0) target = $region25
    $region24: #{mlp_forward.1} parent=1 // pred_region
      %s37 = ssub.s32 1024, 1024
      %38 = vsyncadd [#allocation5], %s37
      %s39 = sshll.u32 [#allocation4], 4
      %s40 = int_to_ptr.vmem [resolvable:$true] %s39
      %45 = dma.hbm_to_vmem [thread:$0]  %s5, 1024, %s40, [#allocation5], 64, 64, 4
    $region25: #{mlp_forward.1} parent=1 // pred_fallthru
      _
    // Predicated region
    $region26: #{mlp_forward.1} parent=1 // pred_check
      _
    $region27: #{mlp_forward.1} parent=1 // pred_check_branch
      %47 = sbr.rel (0) target = $region29
    $region28: #{mlp_forward.1} parent=1 // pred_region
      _
    $region29: #{mlp_forward.1} parent=1 // pred_fallthru
      _
    // Predicated region
    $region30: #{mlp_forward.1} parent=1 // pred_check
      _
    $region31: #{mlp_forward.1} parent=1 // pred_check_branch
      %49 = sbr.rel (0) target = $region33
    $region32: #{mlp_forward.1} parent=1 // pred_region
      %50 = dma.done [#allocation3], 1024
    $region33: #{mlp_forward.1} parent=1 // pred_fallthru
      _
    // Predicated region
    $region34: #{mlp_forward.1} parent=1 // pred_check
      _
    $region35: #{mlp_forward.1} parent=1 // pred_check_branch
      %52 = sbr.rel (0) target = $region37
    $region36: #{mlp_forward.1} parent=1 // pred_region
      %53 = dma.done [#allocation5], 1024
    $region37: #{mlp_forward.1} parent=1 // pred_fallthru
      _
    %v55 = vld [vmem:[%s0] sm:$0xff]
    %v56 = vpack.c.bf16 %v55, %v55
    %v57 = vld [vmem:[%s1] sm:$0xf]
    %v58 = vld [vmem:[%s1 + $0x4] sm:$0xf]
    %v59 = vld [vmem:[%s2] sm:$0x1]
    %v61 = vlaneseq
    %v62 = vshrl.u32 %v61, 7
    %v63 = vsub.s32 0, %v62
    %v64 = vrot.slane %v59, %v63
    %v68 = vunpack.c.l.b16 %v57
    %v69 = vunpack.c.l.b16 %v58
    %v70 = vpack.c.b16 %v69, %v68
    %vm72 = vcmask 130048
    %v74 = vsel %vm72, %v56, 0
    %76 = vmatprep.subr.bf16.mxu0 0
    %77 = vmatpush1.bf16.msra.mxu0 %v70
    %78 = vmatprep.subr.bf16.mxu0 0
    %79 = vmatpush1.bf16.msra.mxu0 0
    %80 = vmatprep.subr.bf16.mxu0 0
    %81 = vmatpush1.bf16.msra.mxu0 0
    %82 = vmatprep.subr.bf16.mxu0 0
    %83 = vmatpush1.bf16.msra.mxu0 0
    %84 = vmatprep.subr.bf16.mxu0 0
    %85 = vmatpush1.bf16.msra.mxu0 0
    %86 = vmatprep.subr.bf16.mxu0 0
    %87 = vmatpush1.bf16.msra.mxu0 0
    %88 = vmatprep.subr.bf16.mxu0 0
    %89 = vmatpush1.bf16.msra.mxu0 0
    %90 = vmatprep.subr.bf16.mxu0 0
    %91 = vmatpush1.bf16.msra.mxu0 0
    %92 = vmatprep.subr.bf16.mxu0 0
    %93 = vmatpush1.bf16.msra.mxu0 0
    %94 = vmatprep.subr.bf16.mxu0 0
    %95 = vmatpush1.bf16.msra.mxu0 0
    %96 = vmatprep.subr.bf16.mxu0 0
    %97 = vmatpush1.bf16.msra.mxu0 0
    %98 = vmatprep.subr.bf16.mxu0 0
    %99 = vmatpush1.bf16.msra.mxu0 0
    %100 = vmatprep.subr.bf16.mxu0 0
    %101 = vmatpush1.bf16.msra.mxu0 0
    %102 = vmatprep.subr.bf16.mxu0 0
    %103 = vmatpush1.bf16.msra.mxu0 0
    %104 = vmatprep.subr.bf16.mxu0 0
    %105 = vmatpush1.bf16.msra.mxu0 0
    %106 = vmatprep.subr.bf16.mxu0 0
    %107 = vmatpush1.bf16.msra.mxu0 0
    %108 = vmatprep.mubr.bf16.mxu0 0
    %109 = vmatmul.mubr.bf16.gmra.mrb[0].mxu0 %v74
    %v110 = vpop.f32.mrb[0].mxu0
    %v111 = vadd.f32 %v64, %v110
    %v112 = vpop.f32.mrb[0].mxu0
    %v113 = vpop.f32.mrb[0].mxu0
    %v114 = vpop.f32.mrb[0].mxu0
    %115 = vdwg.mxu0
    %v116 = vmax.f32 %v111, 0.0
    %v117 = vpack.c.bf16 %v116, %v116
    %v118 = vld [vmem:[#allocation2] sm:$0xf]
    %v119 = vld [vmem:[#allocation2 + $0x4] sm:$0xf]
    %v120 = vld [vmem:[#allocation2 + $0x8] sm:$0xf]
    %v121 = vld [vmem:[#allocation2 + $0xc] sm:$0xf]
    %v122 = vld [vmem:[#allocation2 + $0x10] sm:$0xf]
    %v123 = vld [vmem:[#allocation2 + $0x14] sm:$0xf]
    %v124 = vld [vmem:[#allocation2 + $0x18] sm:$0xf]
    %v125 = vld [vmem:[#allocation2 + $0x1c] sm:$0xf]
    %v126 = vld [vmem:[#allocation2 + $0x20] sm:$0xf]
    %v127 = vld [vmem:[#allocation2 + $0x24] sm:$0xf]
    %v128 = vld [vmem:[#allocation2 + $0x28] sm:$0xf]
    %v129 = vld [vmem:[#allocation2 + $0x2c] sm:$0xf]
    %v130 = vld [vmem:[#allocation2 + $0x30] sm:$0xf]
    %v131 = vld [vmem:[#allocation2 + $0x34] sm:$0xf]
    %v132 = vld [vmem:[#allocation2 + $0x38] sm:$0xf]
    %v133 = vld [vmem:[#allocation2 + $0x3c] sm:$0xf]
    %v134 = vld [vmem:[%s4] sm:$0x1]
    %v136 = vlaneseq
    %v137 = vshrl.u32 %v136, 7
    %v138 = vsub.s32 0, %v137
    %v139 = vrot.slane %v134, %v138
    %v157 = vunpack.c.l.b16 %v118
    %v158 = vunpack.c.l.b16 %v119
    %v159 = vunpack.c.l.b16 %v120
    %v160 = vunpack.c.l.b16 %v121
    %v161 = vunpack.c.l.b16 %v122
    %v162 = vunpack.c.l.b16 %v123
    %v163 = vunpack.c.l.b16 %v124
    %v164 = vunpack.c.l.b16 %v125
    %v165 = vunpack.c.l.b16 %v126
    %v166 = vunpack.c.l.b16 %v127
    %v167 = vunpack.c.l.b16 %v128
    %v168 = vunpack.c.l.b16 %v129
    %v169 = vunpack.c.l.b16 %v130
    %v170 = vunpack.c.l.b16 %v131
    %v171 = vunpack.c.l.b16 %v132
    %v172 = vunpack.c.l.b16 %v133
    %v173 = vpack.c.b16 %v158, %v157
    %v174 = vpack.c.b16 %v160, %v159
    %v175 = vpack.c.b16 %v162, %v161
    %v176 = vpack.c.b16 %v164, %v163
    %v177 = vpack.c.b16 %v166, %v165
    %v178 = vpack.c.b16 %v168, %v167
    %v179 = vpack.c.b16 %v170, %v169
    %v180 = vpack.c.b16 %v172, %v171
    %189 = vmatprep.subr.bf16.mxu0 0
    %190 = vmatpush1.bf16.msra.mxu0 %v173
    %191 = vmatprep.subr.bf16.mxu0 0
    %192 = vmatpush1.bf16.msra.mxu0 %v174
    %193 = vmatprep.subr.bf16.mxu0 0
    %194 = vmatpush1.bf16.msra.mxu0 %v175
    %195 = vmatprep.subr.bf16.mxu0 0
    %196 = vmatpush1.bf16.msra.mxu0 %v176
    %197 = vmatprep.subr.bf16.mxu0 0
    %198 = vmatpush1.bf16.msra.mxu0 %v177
    %199 = vmatprep.subr.bf16.mxu0 0
    %200 = vmatpush1.bf16.msra.mxu0 %v178
    %201 = vmatprep.subr.bf16.mxu0 0
    %202 = vmatpush1.bf16.msra.mxu0 %v179
    %203 = vmatprep.subr.bf16.mxu0 0
    %204 = vmatpush1.bf16.msra.mxu0 %v180
    %205 = vmatprep.subr.bf16.mxu0 0
    %206 = vmatpush1.bf16.msra.mxu0 0
    %207 = vmatprep.subr.bf16.mxu0 0
    %208 = vmatpush1.bf16.msra.mxu0 0
    %209 = vmatprep.subr.bf16.mxu0 0
    %210 = vmatpush1.bf16.msra.mxu0 0
    %211 = vmatprep.subr.bf16.mxu0 0
    %212 = vmatpush1.bf16.msra.mxu0 0
    %213 = vmatprep.subr.bf16.mxu0 0
    %214 = vmatpush1.bf16.msra.mxu0 0
    %215 = vmatprep.subr.bf16.mxu0 0
    %216 = vmatpush1.bf16.msra.mxu0 0
    %217 = vmatprep.subr.bf16.mxu0 0
    %218 = vmatpush1.bf16.msra.mxu0 0
    %219 = vmatprep.subr.bf16.mxu0 0
    %220 = vmatpush1.bf16.msra.mxu0 0
    %221 = vmatprep.mubr.bf16.mxu0 0
    %222 = vmatmul.mubr.bf16.gmra.mrb[0].mxu0 %v117
    %v223 = vpop.f32.mrb[0].mxu0
    %v224 = vadd.f32 %v139, %v223
    %v225 = vpop.f32.mrb[0].mxu0
    %v226 = vpop.f32.mrb[0].mxu0
    %v227 = vpop.f32.mrb[0].mxu0
    %228 = vdwg.mxu0
    %v229 = vmax.f32 %v224, 0.0
    %v230 = vpack.c.bf16 %v229, %v229
    %v231 = vld [vmem:[#allocation4] sm:$0xf]
    %v232 = vld [vmem:[#allocation4 + $0x4] sm:$0xf]
    %v233 = vld [vmem:[#allocation4 + $0x8] sm:$0xf]
    %v234 = vld [vmem:[#allocation4 + $0xc] sm:$0xf]
    %v235 = vld [vmem:[#allocation4 + $0x10] sm:$0xf]
    %v236 = vld [vmem:[#allocation4 + $0x14] sm:$0xf]
    %v237 = vld [vmem:[#allocation4 + $0x18] sm:$0xf]
    %v238 = vld [vmem:[#allocation4 + $0x1c] sm:$0xf]
    %v239 = vld [vmem:[#allocation4 + $0x20] sm:$0xf]
    %v240 = vld [vmem:[#allocation4 + $0x24] sm:$0xf]
    %v241 = vld [vmem:[#allocation4 + $0x28] sm:$0xf]
    %v242 = vld [vmem:[#allocation4 + $0x2c] sm:$0xf]
    %v243 = vld [vmem:[#allocation4 + $0x30] sm:$0xf]
    %v244 = vld [vmem:[#allocation4 + $0x34] sm:$0xf]
    %v245 = vld [vmem:[#allocation4 + $0x38] sm:$0xf]
    %v246 = vld [vmem:[#allocation4 + $0x3c] sm:$0xf]
    %v247 = vld [vmem:[%s6] sm:$0x1]
    %v249 = vlaneseq
    %v250 = vshrl.u32 %v249, 7
    %v251 = vsub.s32 0, %v250
    %v252 = vrot.slane %v247, %v251
    %v270 = vunpack.c.l.b16 %v231
    %v271 = vunpack.c.l.b16 %v232
    %v272 = vunpack.c.l.b16 %v233
    %v273 = vunpack.c.l.b16 %v234
    %v274 = vunpack.c.l.b16 %v235
    %v275 = vunpack.c.l.b16 %v236
    %v276 = vunpack.c.l.b16 %v237
    %v277 = vunpack.c.l.b16 %v238
    %v278 = vunpack.c.l.b16 %v239
    %v279 = vunpack.c.l.b16 %v240
    %v280 = vunpack.c.l.b16 %v241
    %v281 = vunpack.c.l.b16 %v242
    %v282 = vunpack.c.l.b16 %v243
    %v283 = vunpack.c.l.b16 %v244
    %v284 = vunpack.c.l.b16 %v245
    %v285 = vunpack.c.l.b16 %v246
    %v286 = vpack.c.b16 %v271, %v270
    %v287 = vpack.c.b16 %v273, %v272
    %v288 = vpack.c.b16 %v275, %v274
    %v289 = vpack.c.b16 %v277, %v276
    %v290 = vpack.c.b16 %v279, %v278
    %v291 = vpack.c.b16 %v281, %v280
    %v292 = vpack.c.b16 %v283, %v282
    %v293 = vpack.c.b16 %v285, %v284
    %302 = vmatprep.subr.bf16.mxu0 0
    %303 = vmatpush1.bf16.msra.mxu0 %v286
    %304 = vmatprep.subr.bf16.mxu0 0
    %305 = vmatpush1.bf16.msra.mxu0 %v287
    %306 = vmatprep.subr.bf16.mxu0 0
    %307 = vmatpush1.bf16.msra.mxu0 %v288
    %308 = vmatprep.subr.bf16.mxu0 0
    %309 = vmatpush1.bf16.msra.mxu0 %v289
    %310 = vmatprep.subr.bf16.mxu0 0
    %311 = vmatpush1.bf16.msra.mxu0 %v290
    %312 = vmatprep.subr.bf16.mxu0 0
    %313 = vmatpush1.bf16.msra.mxu0 %v291
    %314 = vmatprep.subr.bf16.mxu0 0
    %315 = vmatpush1.bf16.msra.mxu0 %v292
    %316 = vmatprep.subr.bf16.mxu0 0
    %317 = vmatpush1.bf16.msra.mxu0 %v293
    %318 = vmatprep.subr.bf16.mxu0 0
    %319 = vmatpush1.bf16.msra.mxu0 0
    %320 = vmatprep.subr.bf16.mxu0 0
    %321 = vmatpush1.bf16.msra.mxu0 0
    %322 = vmatprep.subr.bf16.mxu0 0
    %323 = vmatpush1.bf16.msra.mxu0 0
    %324 = vmatprep.subr.bf16.mxu0 0
    %325 = vmatpush1.bf16.msra.mxu0 0
    %326 = vmatprep.subr.bf16.mxu0 0
    %327 = vmatpush1.bf16.msra.mxu0 0
    %328 = vmatprep.subr.bf16.mxu0 0
    %329 = vmatpush1.bf16.msra.mxu0 0
    %330 = vmatprep.subr.bf16.mxu0 0
    %331 = vmatpush1.bf16.msra.mxu0 0
    %332 = vmatprep.subr.bf16.mxu0 0
    %333 = vmatpush1.bf16.msra.mxu0 0
    %334 = vmatprep.mubr.bf16.mxu0 0
    %335 = vmatmul.mubr.bf16.gmra.mrb[0].mxu0 %v230
    %v336 = vpop.f32.mrb[0].mxu0
    %v337 = vadd.f32 %v252, %v336
    %v338 = vpop.f32.mrb[0].mxu0
    %v339 = vpop.f32.mrb[0].mxu0
    %v340 = vpop.f32.mrb[0].mxu0
    %341 = vdwg.mxu0
    %342 = vst [vmem:[%s7] sm:$0xff] %v337
    // Predicated region
    $region38: #{mlp_forward.1} parent=1 // pred_check
      _
    $region39: #{mlp_forward.1} parent=1 // pred_check_branch
      %344 = sbr.rel (0) target = $region41
    $region40: #{mlp_forward.1} parent=1 // pred_region
      _
    $region41: #{mlp_forward.1} parent=1 // pred_fallthru
      _
    // Predicated region
    $region42: #{mlp_forward.1} parent=1 // pred_check
      _
    $region43: #{mlp_forward.1} parent=1 // pred_check_branch
      %346 = sbr.rel (0) target = $region45
    $region44: #{mlp_forward.1} parent=1 // pred_region
      _
    $region45: #{mlp_forward.1} parent=1 // pred_fallthru
      _
    %347 = vsyncpa [#allocation3], 1
    %348 = vsyncpa [#allocation5], 1

</llo_original>
